<compile_context>
chip_gen: v7x
topology: tpu7x:2x2x1
jax: 0.10.0
libtpu: 0.0.40
codegen_flags: <defaults>
</compile_context>

<pallas_src>
import numpy as np
import jax
import jax.numpy as jnp
from jax.experimental import pallas as pl
from jax.experimental.pallas import tpu as pltpu

C_OUT = 16
KH = KW = 3
H_IN = W_IN = 28
H_C = H_IN - KH + 1          # 26 conv output rows
W_C = W_IN - KW + 1          # 26 conv output cols
H_P = H_C // 2               # 13 pooled rows
W_P = W_C // 2               # 13 pooled cols
FC1_IN = C_OUT * H_P * W_P   # 2704
FC1_OUT = 128
FC2_OUT = 10

KBAND = KH * W_IN            # 84 : kh-im2col contraction width (a single MXU K tile)
LANE_HALF = 256              # 16 w-slots x 16 channels (13 w-slots used, 3 zero pad)
W_SLOTS = LANE_HALF // C_OUT # 16
CONV_LANES = 2 * LANE_HALF   # 512 : [even-w half | odd-w half]
OUT_LANES = 128              # fc2 output padded to a full lane width


def fused_cnn_kernel(x_ref, mk_ref, cb_ref, w1_ref, b1_ref, w2_ref, b2_ref, o_ref):
    # x_ref : (26, B, 84)  bf16    kh-im2col'd input, batch on sublanes
    # mk_ref: (84, 512)    bf16    banded conv weights, lane(w,c) = (w%2)*256 + (w//2)*16 + c
    # cb_ref: (1, 256)     f32     conv bias in the pooled lane layout (pad w-slots = 0)
    # w1_ref: (13, 256, 128) bf16  fc1 weights permuted to the pooled lane layout
    # b1_ref: (1, 128) f32   w2_ref: (128, 128) bf16   b2_ref: (1, 128) f32
    # o_ref : (B, 128) f32  (first 10 lanes are the logits)
    B = x_ref.shape[1]
    h1_init = jnp.zeros((B, FC1_OUT), jnp.float32) + b1_ref[...]

    def body(i, h1):
        # Rows of lhs are (h, b) for the two conv rows feeding pooled row i.
        lhs = x_ref[pl.ds(2 * i, 2)].reshape(2 * B, KBAND)                   # (2B, 84) bf16
        r = jnp.dot(lhs, mk_ref[...], preferred_element_type=jnp.float32)    # (2B, 512) raw conv
        rw = jnp.maximum(r[:, :LANE_HALF], r[:, LANE_HALF:])                 # W-pool (aligned halves)
        p = jnp.maximum(rw[:B], rw[B:])                                      # H-pool (adjacent rows)
        a = jnp.maximum(p + cb_ref[...], 0.0)                                # deferred bias + ReLU
        return h1 + jnp.dot(a.astype(jnp.bfloat16), w1_ref[i],
                            preferred_element_type=jnp.float32)              # fc1 partial (B, 128)

    h1 = jax.lax.fori_loop(0, H_P, body, h1_init)
    h1 = jnp.maximum(h1, 0.0)
    o_ref[...] = jnp.dot(h1.astype(jnp.bfloat16), w2_ref[...],
                         preferred_element_type=jnp.float32) + b2_ref[...]


def _prep_weights(params):
    """Host-side layout plumbing (traceable): banded conv matrix, permuted/padded FC weights."""
    conv_w, conv_b, fc1_w, fc1_b, fc2_w, fc2_b = params

    # Banded conv matrix: row = kh*28 + w_in, lane(w,c) = (w%2)*256 + (w//2)*16 + c.
    wk = conv_w.reshape(C_OUT, KH, KW).astype(jnp.float32)
    w_idx = np.arange(W_C)
    base_lane = (w_idx % 2) * LANE_HALF + (w_idx // 2) * C_OUT            # (26,)
    col_idx = base_lane[:, None] + np.arange(C_OUT)[None, :]              # (26, 16)
    mk = jnp.zeros((KBAND, CONV_LANES), jnp.float32)
    for kh in range(KH):
        for kw in range(KW):
            rows = kh * W_IN + (w_idx + kw)                               # (26,)
            vals = jnp.broadcast_to(wk[:, kh, kw], (W_C, C_OUT))
            mk = mk.at[rows[:, None], col_idx].set(vals)
    mk = mk.astype(jnp.bfloat16)

    # Conv bias in the pooled 256-lane layout (applied after pooling; pad w-slots stay 0).
    cb = jnp.zeros((W_SLOTS, C_OUT), jnp.float32)
    cb = cb.at[:W_P, :].set(jnp.broadcast_to(conv_b.astype(jnp.float32), (W_P, C_OUT)))
    cb = cb.reshape(1, LANE_HALF)

    # fc1 rows permuted to the pooled lane layout: (h2, w2*16 + c); torch flatten = c*169 + h2*13 + w2.
    w1r = fc1_w.astype(jnp.float32).reshape(C_OUT, H_P, W_P, FC1_OUT)
    w1p = jnp.zeros((H_P, W_SLOTS, C_OUT, FC1_OUT), jnp.float32)
    w1p = w1p.at[:, :W_P, :, :].set(jnp.transpose(w1r, (1, 2, 0, 3)))
    w1p = w1p.reshape(H_P, LANE_HALF, FC1_OUT).astype(jnp.bfloat16)       # (13, 256, 128)
    b1 = fc1_b.astype(jnp.float32).reshape(1, FC1_OUT)

    # fc2 padded to 128 output lanes (unmasked stores); sliced back to 10 outside.
    w2p = jnp.zeros((FC1_OUT, OUT_LANES), jnp.float32)
    w2p = w2p.at[:, :FC2_OUT].set(fc2_w.astype(jnp.float32)).astype(jnp.bfloat16)
    b2p = jnp.zeros((1, OUT_LANES), jnp.float32).at[0, :FC2_OUT].set(fc2_b.astype(jnp.float32))
    return mk, cb, w1p, b1, w2p, b2p


def _round_up(a, m):
    return ((a + m - 1) // m) * m


def _pick_batch_tile(n):
    try:
        kind = jax.devices()[0].device_kind.lower()
    except Exception:
        kind = ""
    # v5-class: 128x128 MXU + 16 MiB default scoped VMEM -> 128; v6e/v7x: 256 fills full M tiles.
    cap = 128 if "v5" in kind else 256
    target = _round_up(max(n, 1), 16)            # bf16 sublane tile
    bt = min(cap, target)
    # For large batches keep >= 2 grid steps so v7x's two TensorCores both get work.
    if target >= 2 * 128 and target < 2 * bt:
        bt = _round_up((target + 1) // 2, 16)
    return bt


def simple_cnn_forward(x, params, b_tile=None):
    N = x.shape[0]
    bt = b_tile if b_tile is not None else _pick_batch_tile(N)
    bt = max(16, _round_up(bt, 16))
    n_pad = _round_up(max(N, 1), bt)

    # Host-side kh-im2col: (Npad, 28, 28) f32 -> (26, Npad, 84) bf16, batch on sublanes.
    x_r = x.reshape(N, H_IN, W_IN).astype(jnp.float32)
    if n_pad != N:
        x_r = jnp.pad(x_r, ((0, n_pad - N), (0, 0), (0, 0)))
    bands = jnp.stack([x_r[:, kh:kh + H_C, :] for kh in range(KH)], axis=2)   # (Npad, 26, 3, 28)
    x_prep = jnp.transpose(bands.reshape(n_pad, H_C, KBAND), (1, 0, 2)).astype(jnp.bfloat16)

    mk, cb, w1p, b1, w2p, b2p = _prep_weights(params)

    out = pl.pallas_call(
        fused_cnn_kernel,
        out_shape=jax.ShapeDtypeStruct((n_pad, OUT_LANES), jnp.float32),
        grid=(n_pad // bt,),
        in_specs=[
            pl.BlockSpec((H_C, bt, KBAND), lambda i: (0, i, 0)),              # input batch tile
            pl.BlockSpec((KBAND, CONV_LANES), lambda i: (0, 0)),              # resident weights
            pl.BlockSpec((1, LANE_HALF), lambda i: (0, 0)),
            pl.BlockSpec((H_P, LANE_HALF, FC1_OUT), lambda i: (0, 0, 0)),
            pl.BlockSpec((1, FC1_OUT), lambda i: (0, 0)),
            pl.BlockSpec((FC1_OUT, OUT_LANES), lambda i: (0, 0)),
            pl.BlockSpec((1, OUT_LANES), lambda i: (0, 0)),
        ],
        out_specs=pl.BlockSpec((bt, OUT_LANES), lambda i: (i, 0)),
        compiler_params=pltpu.CompilerParams(
            dimension_semantics=("parallel",)),
    )(x_prep, mk, cb, w1p, b1, w2p, b2p)
    return out[:N, :FC2_OUT]


def reference_forward(x, params):
    conv_w, conv_b, fc1_w, fc1_b, fc2_w, fc2_b = params
    y = jax.lax.conv_general_dilated(
        x, conv_w, window_strides=(1, 1), padding="VALID",
        dimension_numbers=("NCHW", "OIHW", "NCHW"))
    y = y + conv_b[None, :, None, None]
    y = jnp.maximum(y, 0.0)
    N = x.shape[0]
    y = y.reshape(N, C_OUT, H_P, 2, W_P, 2).max(axis=(3, 5))
    y = y.reshape(N, FC1_IN)
    h = jnp.maximum(y @ fc1_w + fc1_b[None, :], 0.0)
    return h @ fc2_w + fc2_b[None, :]


def init_params(key):
    ks = jax.random.split(key, 6)
    def u(k, shape, fan_in):
        bound = 1.0 / jnp.sqrt(fan_in)
        return jax.random.uniform(k, shape, jnp.float32, -bound, bound)
    conv_w = u(ks[0], (C_OUT, 1, KH, KW), KH * KW)      # torch Conv2d weight (O,I,kh,kw)
    conv_b = u(ks[1], (C_OUT,), KH * KW)
    fc1_w = u(ks[2], (FC1_IN, FC1_OUT), FC1_IN)         # torch (128,2704) stored transposed
    fc1_b = u(ks[3], (FC1_OUT,), FC1_IN)
    fc2_w = u(ks[4], (FC1_OUT, FC2_OUT), FC1_OUT)       # torch (10,128) stored transposed
    fc2_b = u(ks[5], (FC2_OUT,), FC1_OUT)
    return (conv_w, conv_b, fc1_w, fc1_b, fc2_w, fc2_b)


if __name__ == "__main__":
    key = jax.random.PRNGKey(0)
    pkey, xkey, xkey2 = jax.random.split(key, 3)
    params = init_params(pkey)
    fwd = jax.jit(simple_cnn_forward)

    # Required small-shape run (batch=2).
    x = jax.random.normal(xkey, (2, 1, H_IN, W_IN), jnp.float32)
    out = jax.block_until_ready(fwd(x, params))
    assert out.shape == (2, FC2_OUT) and out.dtype == jnp.float32
    ref = jax.block_until_ready(reference_forward(x, params))
    assert jnp.allclose(out, ref, atol=2e-2, rtol=2e-2)

    # Extra check: multi-step grid + batch-padding path (300 -> 2-3 tiles depending on chip).
    xb = jax.random.normal(xkey2, (300, 1, H_IN, W_IN), jnp.float32)
    outb = jax.block_until_ready(fwd(xb, params))
    refb = jax.block_until_ready(reference_forward(xb, params))
    assert outb.shape == (300, FC2_OUT)
    assert jnp.allclose(outb, refb, atol=2e-2, rtol=2e-2)

    print("KERNEL_OK")
</pallas_src>

<mosaic_0001>
module attributes {stable_mosaic.version = 11 : i64} {
  func.func @fused_cnn_kernel(%arg0: i32, %arg1: memref<26x16x84xbf16, #tpu.memory_space<vmem>>, %arg2: memref<84x512xbf16, #tpu.memory_space<vmem>>, %arg3: memref<1x256xf32, #tpu.memory_space<vmem>>, %arg4: memref<13x256x128xbf16, #tpu.memory_space<vmem>>, %arg5: memref<1x128xf32, #tpu.memory_space<vmem>>, %arg6: memref<128x128xbf16, #tpu.memory_space<vmem>>, %arg7: memref<1x128xf32, #tpu.memory_space<vmem>>, %arg8: memref<16x128xf32, #tpu.memory_space<vmem>>) attributes {dimension_semantics = [#tpu.dimension_semantics<parallel>], iteration_bounds = array<i64: 1>, scalar_prefetch = 0 : i64, scratch_operands = 0 : i64, tpu.core_type = #tpu.core_type<tc>, window_params = [{transform_indices = @transform_0, window_bounds = array<i64: 26, 16, 84>}, {pipeline_mode = #tpu.pipeline_mode<synchronous>, transform_indices = @transform_1, window_bounds = array<i64: 84, 512>}, {pipeline_mode = #tpu.pipeline_mode<synchronous>, transform_indices = @transform_2, window_bounds = array<i64: 1, 256>}, {pipeline_mode = #tpu.pipeline_mode<synchronous>, transform_indices = @transform_3, window_bounds = array<i64: 13, 256, 128>}, {pipeline_mode = #tpu.pipeline_mode<synchronous>, transform_indices = @transform_4, window_bounds = array<i64: 1, 128>}, {pipeline_mode = #tpu.pipeline_mode<synchronous>, transform_indices = @transform_5, window_bounds = array<i64: 128, 128>}, {pipeline_mode = #tpu.pipeline_mode<synchronous>, transform_indices = @transform_6, window_bounds = array<i64: 1, 128>}, {transform_indices = @transform_7, window_bounds = array<i64: 16, 128>}]} {
    %cst = arith.constant 0.000000e+00 : f32
    %0 = vector.broadcast %cst : f32 to vector<16x128xf32>
    %c0 = arith.constant 0 : index
    %c0_0 = arith.constant 0 : index
    %1 = vector.load %arg5[%c0, %c0_0] : memref<1x128xf32, #tpu.memory_space<vmem>>, vector<1x128xf32>
    %2 = vector.broadcast %1 : vector<1x128xf32> to vector<16x128xf32>
    %3 = arith.addf %0, %2 : vector<16x128xf32>
    %c0_i32 = arith.constant 0 : i32
    %c13_i32 = arith.constant 13 : i32
    %4 = arith.addi %c0_i32, %c13_i32 : i32
    %c1_i32 = arith.constant 1 : i32
    %5 = scf.for %arg9 = %c0_i32 to %4 step %c1_i32 iter_args(%arg10 = %3) -> (vector<16x128xf32>)  : i32 {
      %c2_i32 = arith.constant 2 : i32
      %15 = arith.muli %c2_i32, %arg9 : i32
      %16 = arith.index_cast %15 : i32 to index
      %c0_10 = arith.constant 0 : index
      %c0_11 = arith.constant 0 : index
      %17 = vector.load %arg1[%16, %c0_10, %c0_11] : memref<26x16x84xbf16, #tpu.memory_space<vmem>>, vector<2x16x84xbf16>
      %18 = vector.shape_cast %17 : vector<2x16x84xbf16> to vector<32x84xbf16>
      %c0_12 = arith.constant 0 : index
      %c0_13 = arith.constant 0 : index
      %19 = vector.load %arg2[%c0_12, %c0_13] : memref<84x512xbf16, #tpu.memory_space<vmem>>, vector<84x512xbf16>
      %cst_14 = arith.constant dense<0.000000e+00> : vector<32x512xf32>
      %20 = tpu.matmul %18, %19, %cst_14 {dimension_numbers = #tpu.dot_dimension_numbers<[1], [0], [0], [1], [0, 0, 1, 1], [], []>} : vector<32x84xbf16>, vector<84x512xbf16>, vector<32x512xf32> -> vector<32x512xf32>
      %21 = vector.extract_strided_slice %20 {offsets = [0, 0], sizes = [32, 256], strides = [1, 1]} : vector<32x512xf32> to vector<32x256xf32>
      %22 = vector.extract_strided_slice %20 {offsets = [0, 256], sizes = [32, 256], strides = [1, 1]} : vector<32x512xf32> to vector<32x256xf32>
      %23 = arith.maximumf %21, %22 : vector<32x256xf32>
      %24 = vector.extract_strided_slice %23 {offsets = [0, 0], sizes = [16, 256], strides = [1, 1]} : vector<32x256xf32> to vector<16x256xf32>
      %25 = vector.extract_strided_slice %23 {offsets = [16, 0], sizes = [16, 256], strides = [1, 1]} : vector<32x256xf32> to vector<16x256xf32>
      %26 = arith.maximumf %24, %25 : vector<16x256xf32>
      %c0_15 = arith.constant 0 : index
      %c0_16 = arith.constant 0 : index
      %27 = vector.load %arg3[%c0_15, %c0_16] : memref<1x256xf32, #tpu.memory_space<vmem>>, vector<1x256xf32>
      %28 = vector.broadcast %27 : vector<1x256xf32> to vector<16x256xf32>
      %29 = arith.addf %26, %28 : vector<16x256xf32>
      %cst_17 = arith.constant 0.000000e+00 : f32
      %30 = vector.broadcast %cst_17 : f32 to vector<16x256xf32>
      %31 = arith.maximumf %29, %30 : vector<16x256xf32>
      %32 = arith.truncf %31 : vector<16x256xf32> to vector<16x256xbf16>
      %33 = arith.index_cast %arg9 : i32 to index
      %c0_18 = arith.constant 0 : index
      %c0_19 = arith.constant 0 : index
      %34 = vector.load %arg4[%33, %c0_18, %c0_19] : memref<13x256x128xbf16, #tpu.memory_space<vmem>>, vector<1x256x128xbf16>
      %35 = vector.shape_cast %34 : vector<1x256x128xbf16> to vector<256x128xbf16>
      %cst_20 = arith.constant dense<0.000000e+00> : vector<16x128xf32>
      %36 = tpu.matmul %32, %35, %cst_20 {dimension_numbers = #tpu.dot_dimension_numbers<[1], [0], [0], [1], [0, 0, 1, 1], [], []>} : vector<16x256xbf16>, vector<256x128xbf16>, vector<16x128xf32> -> vector<16x128xf32>
      %37 = arith.addf %arg10, %36 : vector<16x128xf32>
      scf.yield %37 : vector<16x128xf32>
    }
    %c13_i32_1 = arith.constant 13 : i32
    %cst_2 = arith.constant 0.000000e+00 : f32
    %6 = vector.broadcast %cst_2 : f32 to vector<16x128xf32>
    %7 = arith.maximumf %5, %6 : vector<16x128xf32>
    %8 = arith.truncf %7 : vector<16x128xf32> to vector<16x128xbf16>
    %c0_3 = arith.constant 0 : index
    %c0_4 = arith.constant 0 : index
    %9 = vector.load %arg6[%c0_3, %c0_4] : memref<128x128xbf16, #tpu.memory_space<vmem>>, vector<128x128xbf16>
    %cst_5 = arith.constant dense<0.000000e+00> : vector<16x128xf32>
    %10 = tpu.matmul %8, %9, %cst_5 {dimension_numbers = #tpu.dot_dimension_numbers<[1], [0], [0], [1], [0, 0, 1, 1], [], []>} : vector<16x128xbf16>, vector<128x128xbf16>, vector<16x128xf32> -> vector<16x128xf32>
    %c0_6 = arith.constant 0 : index
    %c0_7 = arith.constant 0 : index
    %11 = vector.load %arg7[%c0_6, %c0_7] : memref<1x128xf32, #tpu.memory_space<vmem>>, vector<1x128xf32>
    %12 = vector.broadcast %11 : vector<1x128xf32> to vector<16x128xf32>
    %13 = arith.addf %10, %12 : vector<16x128xf32>
    %c0_8 = arith.constant 0 : index
    %c0_9 = arith.constant 0 : index
    %14 = vector.load %arg8[%c0_8, %c0_9] : memref<16x128xf32, #tpu.memory_space<vmem>>, vector<16x128xf32>
    tpu.vector_store %arg8[%c0_8, %c0_9], %13 {strides = array<i32>} : memref<16x128xf32, #tpu.memory_space<vmem>>, vector<16x128xf32>,
    return
  }
  func.func @transform_0(%arg0: i32) -> (i32, i32, i32) {
    %c0_i32 = arith.constant 0 : i32
    %c0_i32_0 = arith.constant 0 : i32
    %c0_i32_1 = arith.constant 0 : i32
    return %c0_i32, %arg0, %c0_i32_0 : i32, i32, i32
  }
  func.func @transform_1(%arg0: i32) -> (i32, i32) {
    %c0_i32 = arith.constant 0 : i32
    %c0_i32_0 = arith.constant 0 : i32
    %c0_i32_1 = arith.constant 0 : i32
    return %c0_i32, %c0_i32_0 : i32, i32
  }
  func.func @transform_2(%arg0: i32) -> (i32, i32) {
    %c0_i32 = arith.constant 0 : i32
    %c0_i32_0 = arith.constant 0 : i32
    %c0_i32_1 = arith.constant 0 : i32
    return %c0_i32, %c0_i32_0 : i32, i32
  }
  func.func @transform_3(%arg0: i32) -> (i32, i32, i32) {
    %c0_i32 = arith.constant 0 : i32
    %c0_i32_0 = arith.constant 0 : i32
    %c0_i32_1 = arith.constant 0 : i32
    %c0_i32_2 = arith.constant 0 : i32
    return %c0_i32, %c0_i32_0, %c0_i32_1 : i32, i32, i32
  }
  func.func @transform_4(%arg0: i32) -> (i32, i32) {
    %c0_i32 = arith.constant 0 : i32
    %c0_i32_0 = arith.constant 0 : i32
    %c0_i32_1 = arith.constant 0 : i32
    return %c0_i32, %c0_i32_0 : i32, i32
  }
  func.func @transform_5(%arg0: i32) -> (i32, i32) {
    %c0_i32 = arith.constant 0 : i32
    %c0_i32_0 = arith.constant 0 : i32
    %c0_i32_1 = arith.constant 0 : i32
    return %c0_i32, %c0_i32_0 : i32, i32
  }
  func.func @transform_6(%arg0: i32) -> (i32, i32) {
    %c0_i32 = arith.constant 0 : i32
    %c0_i32_0 = arith.constant 0 : i32
    %c0_i32_1 = arith.constant 0 : i32
    return %c0_i32, %c0_i32_0 : i32, i32
  }
  func.func @transform_7(%arg0: i32) -> (i32, i32) {
    %c0_i32 = arith.constant 0 : i32
    %c0_i32_0 = arith.constant 0 : i32
    return %arg0, %c0_i32 : i32, i32
  }
}

</mosaic_0001>

<llo_original>
// kernel: simple_cnn_forward.1
$region0: #{simple_cnn_forward.1}
  #allocation0 [shape = 'u32[]', space=smem, size = 0x4, offset = 0x4, fixed_abs, tag = 'smem constant byte address 0x4 - core index']
  #allocation1 [shape = 'u32[144,128]{1,0:T(1,128)}', space=vmem, size = 0x12000, scoped, tag = 'internal scratch']
  %s0 = inlined_call_operand.vmem [shape: bf16[26,16,84], index: 0, kind: input, shape index: {}]
  %s1 = inlined_call_operand.vmem [shape: bf16[84,512], index: 1, kind: input, shape index: {}]
  %s2 = inlined_call_operand.vmem [shape: f32[1,256], index: 2, kind: input, shape index: {}]
  %s3 = inlined_call_operand.vmem [shape: bf16[13,256,128], index: 3, kind: input, shape index: {}]
  %s4 = inlined_call_operand.vmem [shape: f32[1,128], index: 4, kind: input, shape index: {}]
  %s5 = inlined_call_operand.vmem [shape: bf16[128,128], index: 5, kind: input, shape index: {}]
  %s6 = inlined_call_operand.vmem [shape: f32[1,128], index: 6, kind: input, shape index: {}]
  %s7 = inlined_call_operand.vmem [shape: f32[16,128], index: 7, kind: output, shape index: {}]
  %s8 = sld [smem:[#allocation0]]
  $region45: #{simple_cnn_forward.1} parent=0
    _
  %s10 = ssub.s32 1, %s8
  %s11 = scalar_select 0, %s10, %s8
  // Predicated region
  $region2: #{simple_cnn_forward.1} parent=0 // pred_check
    _
  $region3: #{simple_cnn_forward.1} parent=0 // pred_check_branch
    %13 = sbr.rel (0) target = $region5
  $region4: #{simple_cnn_forward.1} parent=0 // pred_region
    _
  $region5: #{simple_cnn_forward.1} parent=0 // pred_fallthru
    _
  // Predicated region
  $region6: #{simple_cnn_forward.1} parent=0 // pred_check
    _
  $region7: #{simple_cnn_forward.1} parent=0 // pred_check_branch
    %15 = sbr.rel (0) target = $region9
  $region8: #{simple_cnn_forward.1} parent=0 // pred_region
    _
  $region9: #{simple_cnn_forward.1} parent=0 // pred_fallthru
    _
  // Predicated region
  $region10: #{simple_cnn_forward.1} parent=0 // pred_check
    _
  $region11: #{simple_cnn_forward.1} parent=0 // pred_check_branch
    %17 = sbr.rel (0) target = $region13
  $region12: #{simple_cnn_forward.1} parent=0 // pred_region
    _
  $region13: #{simple_cnn_forward.1} parent=0 // pred_fallthru
    _
  // Predicated region
  $region14: #{simple_cnn_forward.1} parent=0 // pred_check
    _
  $region15: #{simple_cnn_forward.1} parent=0 // pred_check_branch
    %19 = sbr.rel (0) target = $region17
  $region16: #{simple_cnn_forward.1} parent=0 // pred_region
    _
  $region17: #{simple_cnn_forward.1} parent=0 // pred_fallthru
    _
  // Predicated region
  $region18: #{simple_cnn_forward.1} parent=0 // pred_check
    _
  $region19: #{simple_cnn_forward.1} parent=0 // pred_check_branch
    %21 = sbr.rel (0) target = $region21
  $region20: #{simple_cnn_forward.1} parent=0 // pred_region
    _
  $region21: #{simple_cnn_forward.1} parent=0 // pred_fallthru
    _
  // Predicated region
  $region22: #{simple_cnn_forward.1} parent=0 // pred_check
    _
  $region23: #{simple_cnn_forward.1} parent=0 // pred_check_branch
    %23 = sbr.rel (0) target = $region25
  $region24: #{simple_cnn_forward.1} parent=0 // pred_region
    _
  $region25: #{simple_cnn_forward.1} parent=0 // pred_fallthru
    _
  // Predicated region
  $region26: #{simple_cnn_forward.1} parent=0 // pred_check
    _
  $region27: #{simple_cnn_forward.1} parent=0 // pred_check_branch
    %25 = sbr.rel (0) target = $region29
  $region28: #{simple_cnn_forward.1} parent=0 // pred_region
    _
  $region29: #{simple_cnn_forward.1} parent=0 // pred_fallthru
    _
  %v27 = vld [vmem:[%s4] sm:$0x1]
  %v29 = vlaneseq
  %v30 = vshrl.u32 %v29, 7
  %v31 = vsub.s32 0, %v30
  %v32 = vrot.slane %v27, %v31
  %v34 = vadd.f32 %v32, 0.0
  loop: start=0, step=1, limit=13
  $region30: #{simple_cnn_forward.1} parent=0 // loop_pre_header
    _
  $region31: #{simple_cnn_forward.1} parent=0 // loop_header
    %s36 = sphi 0, %s40
    %p37 = scmp.ge.s32.totalorder %s36, 13
    %v41 = vphi %v34, %v525
    %v42 = vphi %v34, %v526
  $region32: #{simple_cnn_forward.1} parent=0 // loop_header_branch
    %39 = sbr.rel (%p37) target = $region36
  $region33: #{simple_cnn_forward.1} parent=0 // loop_body
    %s43 = smul.u32 %s36, 2
    %s44 = smul.u32 %s43, 2
    %s45 = smul.addr %s44, 4
    %s46 = scalar_lea.vmem %s0, %s45
    %v47 = vld [vmem:[%s46] sm:$0xf]
    %v48 = vld [vmem:[%s46 + $0x4] sm:$0xf]
    %v49 = vld [vmem:[%s46 + $0x8] sm:$0xf]
    %v50 = vld [vmem:[%s46 + $0xc] sm:$0xf]
    %v51 = vld [vmem:[%s1] sm:$0xff]
    %v52 = vld [vmem:[%s1 + $0x8] sm:$0xff]
    %v53 = vld [vmem:[%s1 + $0x10] sm:$0xff]
    %v54 = vld [vmem:[%s1 + $0x18] sm:$0xff]
    %v55 = vld [vmem:[%s1 + $0x20] sm:$0xff]
    %v56 = vld [vmem:[%s1 + $0x28] sm:$0xff]
    %v57 = vld [vmem:[%s1 + $0x30] sm:$0xff]
    %v58 = vld [vmem:[%s1 + $0x38] sm:$0xff]
    %v59 = vld [vmem:[%s1 + $0x40] sm:$0xff]
    %v60 = vld [vmem:[%s1 + $0x48] sm:$0xff]
    %v61 = vld [vmem:[%s1 + $0x50] sm:$0xff]
    %v62 = vld [vmem:[%s1 + $0x58] sm:$0xff]
    %v63 = vld [vmem:[%s1 + $0x60] sm:$0xff]
    %v64 = vld [vmem:[%s1 + $0x68] sm:$0xff]
    %v65 = vld [vmem:[%s1 + $0x70] sm:$0xff]
    %v66 = vld [vmem:[%s1 + $0x78] sm:$0xff]
    %v67 = vld [vmem:[%s1 + $0x80] sm:$0xff]
    %v68 = vld [vmem:[%s1 + $0x88] sm:$0xff]
    %v69 = vld [vmem:[%s1 + $0x90] sm:$0xff]
    %v70 = vld [vmem:[%s1 + $0x98] sm:$0xff]
    %v71 = vld [vmem:[%s1 + $0xa0] sm:$0x33]
    %v72 = vld [vmem:[%s1 + $0xa8] sm:$0x33]
    %v77 = vunpack.c.l.b16 %v47
    %v78 = vunpack.c.l.b16 %v48
    %v79 = vunpack.c.l.b16 %v49
    %v80 = vunpack.c.l.b16 %v50
    %v81 = vpack.c.b16 %v78, %v77
    %v82 = vpack.c.b16 %v80, %v79
    %v105 = vunpack.c.l.b16 %v51
    %v106 = vunpack.c.h.b16 %v51
    %v107 = vunpack.c.l.b16 %v52
    %v108 = vunpack.c.h.b16 %v52
    %v109 = vunpack.c.l.b16 %v53
    %v110 = vunpack.c.h.b16 %v53
    %v111 = vunpack.c.l.b16 %v54
    %v112 = vunpack.c.h.b16 %v54
    %v113 = vunpack.c.l.b16 %v55
    %v114 = vunpack.c.h.b16 %v55
    %v115 = vunpack.c.l.b16 %v56
    %v116 = vunpack.c.h.b16 %v56
    %v117 = vunpack.c.l.b16 %v57
    %v118 = vunpack.c.h.b16 %v57
    %v119 = vunpack.c.l.b16 %v58
    %v120 = vunpack.c.h.b16 %v58
    %v121 = vunpack.c.l.b16 %v59
    %v122 = vunpack.c.h.b16 %v59
    %v123 = vunpack.c.l.b16 %v60
    %v124 = vunpack.c.h.b16 %v60
    %v125 = vunpack.c.l.b16 %v61
    %v126 = vunpack.c.h.b16 %v61
    %v127 = vunpack.c.l.b16 %v62
    %v128 = vunpack.c.h.b16 %v62
    %v129 = vunpack.c.l.b16 %v63
    %v130 = vunpack.c.h.b16 %v63
    %v131 = vunpack.c.l.b16 %v64
    %v132 = vunpack.c.h.b16 %v64
    %v133 = vunpack.c.l.b16 %v65
    %v134 = vunpack.c.h.b16 %v65
    %v135 = vunpack.c.l.b16 %v66
    %v136 = vunpack.c.h.b16 %v66
    %v137 = vunpack.c.l.b16 %v67
    %v138 = vunpack.c.h.b16 %v67
    %v139 = vunpack.c.l.b16 %v68
    %v140 = vunpack.c.h.b16 %v68
    %v141 = vunpack.c.l.b16 %v69
    %v142 = vunpack.c.h.b16 %v69
    %v143 = vunpack.c.l.b16 %v70
    %v144 = vunpack.c.h.b16 %v70
    %v145 = vunpack.c.l.b16 %v71
    %v146 = vunpack.c.h.b16 %v71
    %v147 = vunpack.c.l.b16 %v72
    %v148 = vunpack.c.h.b16 %v72
    %v149 = vpack.c.b16 %v109, %v105
    %v150 = vpack.c.b16 %v110, %v106
    %v151 = vpack.c.b16 %v111, %v107
    %v152 = vpack.c.b16 %v112, %v108
    %v153 = vpack.c.b16 %v117, %v113
    %v154 = vpack.c.b16 %v118, %v114
    %v155 = vpack.c.b16 %v119, %v115
    %v156 = vpack.c.b16 %v120, %v116
    %v157 = vpack.c.b16 %v125, %v121
    %v158 = vpack.c.b16 %v126, %v122
    %v159 = vpack.c.b16 %v127, %v123
    %v160 = vpack.c.b16 %v128, %v124
    %v161 = vpack.c.b16 %v133, %v129
    %v162 = vpack.c.b16 %v134, %v130
    %v163 = vpack.c.b16 %v135, %v131
    %v164 = vpack.c.b16 %v136, %v132
    %v165 = vpack.c.b16 %v141, %v137
    %v166 = vpack.c.b16 %v142, %v138
    %v167 = vpack.c.b16 %v143, %v139
    %v168 = vpack.c.b16 %v144, %v140
    %v169 = vpack.c.b16 %v145, %v145
    %v170 = vpack.c.b16 %v146, %v146
    %v171 = vpack.c.b16 %v147, %v147
    %v172 = vpack.c.b16 %v148, %v148
    %vm193 = vcmask 687104
    %v195 = vsel %vm193, %v81, 0
    %v198 = vsel %vm193, %v82, 0
    %vm200 = vcmask 1041408
    %v202 = vsel %vm200, %v169, 0
    %v205 = vsel %vm200, %v170, 0
    %v208 = vsel %vm200, %v171, 0
    %v211 = vsel %vm200, %v172, 0
    %213 = vmatprep.subr.bf16.mxu0 %v150
    %214 = vmatpush1.bf16.msra.mxu0 %v149
    %215 = vmatprep.subr.bf16.mxu0 %v154
    %216 = vmatpush1.bf16.msra.mxu0 %v153
    %217 = vmatprep.subr.bf16.mxu0 %v158
    %218 = vmatpush1.bf16.msra.mxu0 %v157
    %219 = vmatprep.subr.bf16.mxu0 %v162
    %220 = vmatpush1.bf16.msra.mxu0 %v161
    %221 = vmatprep.subr.bf16.mxu0 %v166
    %222 = vmatpush1.bf16.msra.mxu0 %v165
    %223 = vmatprep.subr.bf16.mxu0 %v205
    %224 = vmatpush1.bf16.msra.mxu0 %v202
    %225 = vmatprep.subr.bf16.mxu0 0
    %226 = vmatpush1.bf16.msra.mxu0 0
    %227 = vmatprep.subr.bf16.mxu0 0
    %228 = vmatpush1.bf16.msra.mxu0 0
    %229 = vmatprep.subr.bf16.mxu0 0
    %230 = vmatpush1.bf16.msra.mxu0 0
    %231 = vmatprep.subr.bf16.mxu0 0
    %232 = vmatpush1.bf16.msra.mxu0 0
    %233 = vmatprep.subr.bf16.mxu0 0
    %234 = vmatpush1.bf16.msra.mxu0 0
    %235 = vmatprep.subr.bf16.mxu0 0
    %236 = vmatpush1.bf16.msra.mxu0 0
    %237 = vmatprep.subr.bf16.mxu0 0
    %238 = vmatpush1.bf16.msra.mxu0 0
    %239 = vmatprep.subr.bf16.mxu0 0
    %240 = vmatpush1.bf16.msra.mxu0 0
    %241 = vmatprep.subr.bf16.mxu0 0
    %242 = vmatpush1.bf16.msra.mxu0 0
    %243 = vmatprep.subr.bf16.mxu0 0
    %244 = vmatpush1.bf16.msra.mxu0 0
    %245 = vmatprep.mubr.bf16.mxu0 0
    %246 = vmatmul.mubr.bf16.gmra.mrb[0].mxu0 %v195
    %v247 = vpop.f32.mrb[0].mxu0
    %v248 = vadd.f32 0.0, %v247
    %v249 = vpop.f32.mrb[0].mxu0
    %v250 = vadd.f32 0.0, %v249
    %v251 = vpop.f32.mrb[0].mxu0
    %v252 = vadd.f32 0.0, %v251
    %v253 = vpop.f32.mrb[0].mxu0
    %v254 = vadd.f32 0.0, %v253
    %255 = vmatprep.mubr.bf16.mxu0 0
    %256 = vmatmul.mubr.bf16.gmra.mrb[0].mxu0 %v198
    %v257 = vpop.f32.mrb[0].mxu0
    %v258 = vadd.f32 0.0, %v257
    %v259 = vpop.f32.mrb[0].mxu0
    %v260 = vadd.f32 0.0, %v259
    %v261 = vpop.f32.mrb[0].mxu0
    %v262 = vadd.f32 0.0, %v261
    %v263 = vpop.f32.mrb[0].mxu0
    %v264 = vadd.f32 0.0, %v263
    %265 = vdwg.mxu0
    %266 = vmatprep.subr.bf16.mxu0 %v152
    %267 = vmatpush1.bf16.msra.mxu0 %v151
    %268 = vmatprep.subr.bf16.mxu0 %v156
    %269 = vmatpush1.bf16.msra.mxu0 %v155
    %270 = vmatprep.subr.bf16.mxu0 %v160
    %271 = vmatpush1.bf16.msra.mxu0 %v159
    %272 = vmatprep.subr.bf16.mxu0 %v164
    %273 = vmatpush1.bf16.msra.mxu0 %v163
    %274 = vmatprep.subr.bf16.mxu0 %v168
    %275 = vmatpush1.bf16.msra.mxu0 %v167
    %276 = vmatprep.subr.bf16.mxu0 %v211
    %277 = vmatpush1.bf16.msra.mxu0 %v208
    %278 = vmatprep.subr.bf16.mxu0 0
    %279 = vmatpush1.bf16.msra.mxu0 0
    %280 = vmatprep.subr.bf16.mxu0 0
    %281 = vmatpush1.bf16.msra.mxu0 0
    %282 = vmatprep.subr.bf16.mxu0 0
    %283 = vmatpush1.bf16.msra.mxu0 0
    %284 = vmatprep.subr.bf16.mxu0 0
    %285 = vmatpush1.bf16.msra.mxu0 0
    %286 = vmatprep.subr.bf16.mxu0 0
    %287 = vmatpush1.bf16.msra.mxu0 0
    %288 = vmatprep.subr.bf16.mxu0 0
    %289 = vmatpush1.bf16.msra.mxu0 0
    %290 = vmatprep.subr.bf16.mxu0 0
    %291 = vmatpush1.bf16.msra.mxu0 0
    %292 = vmatprep.subr.bf16.mxu0 0
    %293 = vmatpush1.bf16.msra.mxu0 0
    %294 = vmatprep.subr.bf16.mxu0 0
    %295 = vmatpush1.bf16.msra.mxu0 0
    %296 = vmatprep.subr.bf16.mxu0 0
    %297 = vmatpush1.bf16.msra.mxu0 0
    %298 = vmatprep.mubr.bf16.mxu0 0
    %299 = vmatmul.mubr.bf16.gmra.mrb[0].mxu0 %v195
    %v300 = vpop.f32.mrb[0].mxu0
    %v301 = vadd.f32 0.0, %v300
    %v302 = vpop.f32.mrb[0].mxu0
    %v303 = vadd.f32 0.0, %v302
    %v304 = vpop.f32.mrb[0].mxu0
    %v305 = vadd.f32 0.0, %v304
    %v306 = vpop.f32.mrb[0].mxu0
    %v307 = vadd.f32 0.0, %v306
    %308 = vmatprep.mubr.bf16.mxu0 0
    %309 = vmatmul.mubr.bf16.gmra.mrb[0].mxu0 %v198
    %v310 = vpop.f32.mrb[0].mxu0
    %v311 = vadd.f32 0.0, %v310
    %v312 = vpop.f32.mrb[0].mxu0
    %v313 = vadd.f32 0.0, %v312
    %v314 = vpop.f32.mrb[0].mxu0
    %v315 = vadd.f32 0.0, %v314
    %v316 = vpop.f32.mrb[0].mxu0
    %v317 = vadd.f32 0.0, %v316
    %318 = vdwg.mxu0
    %v319 = vmax.f32 %v248, %v301
    %v320 = vmax.f32 %v250, %v303
    %v321 = vmax.f32 %v252, %v305
    %v322 = vmax.f32 %v254, %v307
    %v323 = vmax.f32 %v258, %v311
    %v324 = vmax.f32 %v260, %v313
    %v325 = vmax.f32 %v262, %v315
    %v326 = vmax.f32 %v264, %v317
    %v327 = vmax.f32 %v319, %v323
    %v328 = vmax.f32 %v320, %v324
    %v329 = vmax.f32 %v321, %v325
    %v330 = vmax.f32 %v322, %v326
    %v331 = vld [vmem:[%s2] sm:$0x3]
    %v333 = vlaneseq
    %v334 = vshrl.u32 %v333, 7
    %v335 = vsub.s32 0, %v334
    %v336 = vrot.slane %v331, %v335
    %v337 = vlaneseq
    %v338 = vshrl.u32 %v337, 7
    %v339 = vsub.s32 1, %v338
    %v340 = vrot.slane %v331, %v339
    %v343 = vadd.f32 %v327, %v336
    %v344 = vadd.f32 %v328, %v340
    %v345 = vadd.f32 %v329, %v336
    %v346 = vadd.f32 %v330, %v340
    %v347 = vmax.f32 %v343, 0.0
    %v348 = vmax.f32 %v344, 0.0
    %v349 = vmax.f32 %v345, 0.0
    %v350 = vmax.f32 %v346, 0.0
    %v351 = vpack.c.bf16 %v349, %v347
    %v352 = vpack.c.bf16 %v350, %v348
    %s353 = smul.u32 %s36, 32
    %s354 = smul.addr %s353, 4
    %s355 = scalar_lea.vmem %s3, %s354
    %v356 = vld [vmem:[%s355] sm:$0xf]
    %v357 = vld [vmem:[%s355 + $0x4] sm:$0xf]
    %v358 = vld [vmem:[%s355 + $0x8] sm:$0xf]
    %v359 = vld [vmem:[%s355 + $0xc] sm:$0xf]
    %v360 = vld [vmem:[%s355 + $0x10] sm:$0xf]
    %v361 = vld [vmem:[%s355 + $0x14] sm:$0xf]
    %v362 = vld [vmem:[%s355 + $0x18] sm:$0xf]
    %v363 = vld [vmem:[%s355 + $0x1c] sm:$0xf]
    %v364 = vld [vmem:[%s355 + $0x20] sm:$0xf]
    %v365 = vld [vmem:[%s355 + $0x24] sm:$0xf]
    %v366 = vld [vmem:[%s355 + $0x28] sm:$0xf]
    %v367 = vld [vmem:[%s355 + $0x2c] sm:$0xf]
    %v368 = vld [vmem:[%s355 + $0x30] sm:$0xf]
    %v369 = vld [vmem:[%s355 + $0x34] sm:$0xf]
    %v370 = vld [vmem:[%s355 + $0x38] sm:$0xf]
    %v371 = vld [vmem:[%s355 + $0x3c] sm:$0xf]
    %v372 = vld [vmem:[%s355 + $0x40] sm:$0xf]
    %v373 = vld [vmem:[%s355 + $0x44] sm:$0xf]
    %v374 = vld [vmem:[%s355 + $0x48] sm:$0xf]
    %v375 = vld [vmem:[%s355 + $0x4c] sm:$0xf]
    %v376 = vld [vmem:[%s355 + $0x50] sm:$0xf]
    %v377 = vld [vmem:[%s355 + $0x54] sm:$0xf]
    %v378 = vld [vmem:[%s355 + $0x58] sm:$0xf]
    %v379 = vld [vmem:[%s355 + $0x5c] sm:$0xf]
    %v380 = vld [vmem:[%s355 + $0x60] sm:$0xf]
    %v381 = vld [vmem:[%s355 + $0x64] sm:$0xf]
    %v382 = vld [vmem:[%s355 + $0x68] sm:$0xf]
    %v383 = vld [vmem:[%s355 + $0x6c] sm:$0xf]
    %v384 = vld [vmem:[%s355 + $0x70] sm:$0xf]
    %v385 = vld [vmem:[%s355 + $0x74] sm:$0xf]
    %v386 = vld [vmem:[%s355 + $0x78] sm:$0xf]
    %v387 = vld [vmem:[%s355 + $0x7c] sm:$0xf]
    %v420 = vunpack.c.l.b16 %v356
    %v421 = vunpack.c.l.b16 %v357
    %v422 = vunpack.c.l.b16 %v358
    %v423 = vunpack.c.l.b16 %v359
    %v424 = vunpack.c.l.b16 %v360
    %v425 = vunpack.c.l.b16 %v361
    %v426 = vunpack.c.l.b16 %v362
    %v427 = vunpack.c.l.b16 %v363
    %v428 = vunpack.c.l.b16 %v364
    %v429 = vunpack.c.l.b16 %v365
    %v430 = vunpack.c.l.b16 %v366
    %v431 = vunpack.c.l.b16 %v367
    %v432 = vunpack.c.l.b16 %v368
    %v433 = vunpack.c.l.b16 %v369
    %v434 = vunpack.c.l.b16 %v370
    %v435 = vunpack.c.l.b16 %v371
    %v436 = vunpack.c.l.b16 %v372
    %v437 = vunpack.c.l.b16 %v373
    %v438 = vunpack.c.l.b16 %v374
    %v439 = vunpack.c.l.b16 %v375
    %v440 = vunpack.c.l.b16 %v376
    %v441 = vunpack.c.l.b16 %v377
    %v442 = vunpack.c.l.b16 %v378
    %v443 = vunpack.c.l.b16 %v379
    %v444 = vunpack.c.l.b16 %v380
    %v445 = vunpack.c.l.b16 %v381
    %v446 = vunpack.c.l.b16 %v382
    %v447 = vunpack.c.l.b16 %v383
    %v448 = vunpack.c.l.b16 %v384
    %v449 = vunpack.c.l.b16 %v385
    %v450 = vunpack.c.l.b16 %v386
    %v451 = vunpack.c.l.b16 %v387
    %v452 = vpack.c.b16 %v421, %v420
    %v453 = vpack.c.b16 %v423, %v422
    %v454 = vpack.c.b16 %v425, %v424
    %v455 = vpack.c.b16 %v427, %v426
    %v456 = vpack.c.b16 %v429, %v428
    %v457 = vpack.c.b16 %v431, %v430
    %v458 = vpack.c.b16 %v433, %v432
    %v459 = vpack.c.b16 %v435, %v434
    %v460 = vpack.c.b16 %v437, %v436
    %v461 = vpack.c.b16 %v439, %v438
    %v462 = vpack.c.b16 %v441, %v440
    %v463 = vpack.c.b16 %v443, %v442
    %v464 = vpack.c.b16 %v445, %v444
    %v465 = vpack.c.b16 %v447, %v446
    %v466 = vpack.c.b16 %v449, %v448
    %v467 = vpack.c.b16 %v451, %v450
    %484 = vmatprep.subr.bf16.mxu0 0
    %485 = vmatpush1.bf16.msra.mxu0 %v452
    %486 = vmatprep.subr.bf16.mxu0 0
    %487 = vmatpush1.bf16.msra.mxu0 %v453
    %488 = vmatprep.subr.bf16.mxu0 0
    %489 = vmatpush1.bf16.msra.mxu0 %v454
    %490 = vmatprep.subr.bf16.mxu0 0
    %491 = vmatpush1.bf16.msra.mxu0 %v455
    %492 = vmatprep.subr.bf16.mxu0 0
    %493 = vmatpush1.bf16.msra.mxu0 %v456
    %494 = vmatprep.subr.bf16.mxu0 0
    %495 = vmatpush1.bf16.msra.mxu0 %v457
    %496 = vmatprep.subr.bf16.mxu0 0
    %497 = vmatpush1.bf16.msra.mxu0 %v458
    %498 = vmatprep.subr.bf16.mxu0 0
    %499 = vmatpush1.bf16.msra.mxu0 %v459
    %500 = vmatprep.subr.bf16.mxu0 0
    %501 = vmatpush1.bf16.msra.mxu0 %v460
    %502 = vmatprep.subr.bf16.mxu0 0
    %503 = vmatpush1.bf16.msra.mxu0 %v461
    %504 = vmatprep.subr.bf16.mxu0 0
    %505 = vmatpush1.bf16.msra.mxu0 %v462
    %506 = vmatprep.subr.bf16.mxu0 0
    %507 = vmatpush1.bf16.msra.mxu0 %v463
    %508 = vmatprep.subr.bf16.mxu0 0
    %509 = vmatpush1.bf16.msra.mxu0 %v464
    %510 = vmatprep.subr.bf16.mxu0 0
    %511 = vmatpush1.bf16.msra.mxu0 %v465
    %512 = vmatprep.subr.bf16.mxu0 0
    %513 = vmatpush1.bf16.msra.mxu0 %v466
    %514 = vmatprep.subr.bf16.mxu0 0
    %515 = vmatpush1.bf16.msra.mxu0 %v467
    %516 = vmatprep.mubr.bf16.mxu0 %v352
    %517 = vmatmul.mubr.bf16.gmra.mrb[0].mxu0 %v351
    %v518 = vpop.f32.mrb[0].mxu0
    %v519 = vadd.f32 0.0, %v518
    %v520 = vpop.f32.mrb[0].mxu0
    %v521 = vpop.f32.mrb[0].mxu0
    %v522 = vadd.f32 0.0, %v521
    %v523 = vpop.f32.mrb[0].mxu0
    %524 = vdwg.mxu0
    %v525 = vadd.f32 %v41, %v519
    %v526 = vadd.f32 %v42, %v522
  $region34: #{simple_cnn_forward.1} parent=0 // loop_footer
    %s40 = sadd.s32 1, %s36
  $region35: #{simple_cnn_forward.1} parent=0 // loop_footer_branch
    %35 = sbr.rel target = $region31
  $region36: #{simple_cnn_forward.1} parent=0 // loop_exit
    _
  %v527 = vmax.f32 %v41, 0.0
  %v528 = vmax.f32 %v42, 0.0
  %v529 = vpack.c.bf16 %v528, %v527
  %v530 = vld [vmem:[%s5] sm:$0xf]
  %v531 = vld [vmem:[%s5 + $0x4] sm:$0xf]
  %v532 = vld [vmem:[%s5 + $0x8] sm:$0xf]
  %v533 = vld [vmem:[%s5 + $0xc] sm:$0xf]
  %v534 = vld [vmem:[%s5 + $0x10] sm:$0xf]
  %v535 = vld [vmem:[%s5 + $0x14] sm:$0xf]
  %v536 = vld [vmem:[%s5 + $0x18] sm:$0xf]
  %v537 = vld [vmem:[%s5 + $0x1c] sm:$0xf]
  %v538 = vld [vmem:[%s5 + $0x20] sm:$0xf]
  %v539 = vld [vmem:[%s5 + $0x24] sm:$0xf]
  %v540 = vld [vmem:[%s5 + $0x28] sm:$0xf]
  %v541 = vld [vmem:[%s5 + $0x2c] sm:$0xf]
  %v542 = vld [vmem:[%s5 + $0x30] sm:$0xf]
  %v543 = vld [vmem:[%s5 + $0x34] sm:$0xf]
  %v544 = vld [vmem:[%s5 + $0x38] sm:$0xf]
  %v545 = vld [vmem:[%s5 + $0x3c] sm:$0xf]
  %v546 = vld [vmem:[%s6] sm:$0x1]
  %v548 = vlaneseq
  %v549 = vshrl.u32 %v548, 7
  %v550 = vsub.s32 0, %v549
  %v551 = vrot.slane %v546, %v550
  %v569 = vunpack.c.l.b16 %v530
  %v570 = vunpack.c.l.b16 %v531
  %v571 = vunpack.c.l.b16 %v532
  %v572 = vunpack.c.l.b16 %v533
  %v573 = vunpack.c.l.b16 %v534
  %v574 = vunpack.c.l.b16 %v535
  %v575 = vunpack.c.l.b16 %v536
  %v576 = vunpack.c.l.b16 %v537
  %v577 = vunpack.c.l.b16 %v538
  %v578 = vunpack.c.l.b16 %v539
  %v579 = vunpack.c.l.b16 %v540
  %v580 = vunpack.c.l.b16 %v541
  %v581 = vunpack.c.l.b16 %v542
  %v582 = vunpack.c.l.b16 %v543
  %v583 = vunpack.c.l.b16 %v544
  %v584 = vunpack.c.l.b16 %v545
  %v585 = vpack.c.b16 %v570, %v569
  %v586 = vpack.c.b16 %v572, %v571
  %v587 = vpack.c.b16 %v574, %v573
  %v588 = vpack.c.b16 %v576, %v575
  %v589 = vpack.c.b16 %v578, %v577
  %v590 = vpack.c.b16 %v580, %v579
  %v591 = vpack.c.b16 %v582, %v581
  %v592 = vpack.c.b16 %v584, %v583
  %601 = vmatprep.subr.bf16.mxu0 0
  %602 = vmatpush1.bf16.msra.mxu0 %v585
  %603 = vmatprep.subr.bf16.mxu0 0
  %604 = vmatpush1.bf16.msra.mxu0 %v586
  %605 = vmatprep.subr.bf16.mxu0 0
  %606 = vmatpush1.bf16.msra.mxu0 %v587
  %607 = vmatprep.subr.bf16.mxu0 0
  %608 = vmatpush1.bf16.msra.mxu0 %v588
  %609 = vmatprep.subr.bf16.mxu0 0
  %610 = vmatpush1.bf16.msra.mxu0 %v589
  %611 = vmatprep.subr.bf16.mxu0 0
  %612 = vmatpush1.bf16.msra.mxu0 %v590
  %613 = vmatprep.subr.bf16.mxu0 0
  %614 = vmatpush1.bf16.msra.mxu0 %v591
  %615 = vmatprep.subr.bf16.mxu0 0
  %616 = vmatpush1.bf16.msra.mxu0 %v592
  %617 = vmatprep.subr.bf16.mxu0 0
  %618 = vmatpush1.bf16.msra.mxu0 0
  %619 = vmatprep.subr.bf16.mxu0 0
  %620 = vmatpush1.bf16.msra.mxu0 0
  %621 = vmatprep.subr.bf16.mxu0 0
  %622 = vmatpush1.bf16.msra.mxu0 0
  %623 = vmatprep.subr.bf16.mxu0 0
  %624 = vmatpush1.bf16.msra.mxu0 0
  %625 = vmatprep.subr.bf16.mxu0 0
  %626 = vmatpush1.bf16.msra.mxu0 0
  %627 = vmatprep.subr.bf16.mxu0 0
  %628 = vmatpush1.bf16.msra.mxu0 0
  %629 = vmatprep.subr.bf16.mxu0 0
  %630 = vmatpush1.bf16.msra.mxu0 0
  %631 = vmatprep.subr.bf16.mxu0 0
  %632 = vmatpush1.bf16.msra.mxu0 0
  %633 = vmatprep.mubr.bf16.mxu0 0
  %634 = vmatmul.mubr.bf16.gmra.mrb[0].mxu0 %v529
  %v635 = vpop.f32.mrb[0].mxu0
  %v636 = vadd.f32 %v551, %v635
  %v637 = vpop.f32.mrb[0].mxu0
  %v638 = vpop.f32.mrb[0].mxu0
  %v639 = vadd.f32 %v551, %v638
  %v640 = vpop.f32.mrb[0].mxu0
  %641 = vdwg.mxu0
  %642 = vst [vmem:[%s7] sm:$0xff] %v636
  %643 = vst [vmem:[%s7 + $0x8] sm:$0xff] %v639
  // Predicated region
  $region37: #{simple_cnn_forward.1} parent=0 // pred_check
    _
  $region38: #{simple_cnn_forward.1} parent=0 // pred_check_branch
    %645 = sbr.rel (0) target = $region40
  $region39: #{simple_cnn_forward.1} parent=0 // pred_region
    _
  $region40: #{simple_cnn_forward.1} parent=0 // pred_fallthru
    _
  // Predicated region
  $region41: #{simple_cnn_forward.1} parent=0 // pred_check
    _
  $region42: #{simple_cnn_forward.1} parent=0 // pred_check_branch
    %647 = sbr.rel (0) target = $region44
  $region43: #{simple_cnn_forward.1} parent=0 // pred_region
    _
  $region44: #{simple_cnn_forward.1} parent=0 // pred_fallthru
    _

</llo_original>
